<compile_context>
chip_gen: v7x
topology: tpu7x:2x2x1
jax: 0.10.0
libtpu: 0.0.40
codegen_flags: <defaults>
</compile_context>

<pallas_src>
import functools

import jax
import jax.numpy as jnp
from jax import lax
from jax.experimental import pallas as pl
from jax.experimental.pallas import tpu as pltpu

KH = KW = 3          # conv kernel size
BN_EPS = 1e-5
STATS_LANES = 128    # lane-padded per-tile stats block (col 0 = sum, col 1 = sumsq)


def _conv_stats_kernel(w_ref, xcol_ref, conv_ref, stats_ref):
    """Pass 1: 3x3 conv as a single K=9*Cin matmul + per-tile BN partial sums.

    w_ref    : (Cout, 9*Cin)   bf16  -- full weight, identical every grid step
    xcol_ref : (9*Cin, T)      bf16  -- pixel tile, pixels on the lane axis
    conv_ref : (Cout, T)       bf16  -- conv output tile (lane-dense stores)
    stats_ref: (Cout, 128)     f32   -- col 0 = sum over tile, col 1 = sum of squares
    """
    acc = jnp.dot(w_ref[...], xcol_ref[...], preferred_element_type=jnp.float32)
    conv_ref[...] = acc.astype(conv_ref.dtype)

    # One-pass sum / sum-of-squares accumulated in f32 from the f32 accumulator.
    # TODO(synk): a shifted (E[(x-K)^2]) formulation would be safer against
    # cancellation if conv outputs ever have mean >> spread at real scales.
    s = jnp.sum(acc, axis=1, keepdims=True)              # (Cout, 1)
    ss = jnp.sum(acc * acc, axis=1, keepdims=True)       # (Cout, 1)
    lane = lax.broadcasted_iota(jnp.int32, stats_ref.shape, 1)
    stats_ref[...] = jnp.where(lane == 0, s, jnp.where(lane == 1, ss, 0.0))


def _bn_relu_kernel(conv_ref, scale_ref, shift_ref, o_ref):
    """Pass 2: fused per-channel affine (BatchNorm folded) + ReLU.

    conv_ref : (Cout, T) bf16 ; scale_ref/shift_ref : (Cout, 1) f32 ; o_ref : (Cout, T) f32
    """
    y = conv_ref[...].astype(jnp.float32) * scale_ref[...] + shift_ref[...]
    o_ref[...] = jnp.maximum(y, 0.0).astype(o_ref.dtype)


@functools.partial(jax.jit, static_argnames=("max_pixel_tile",))
def block_forward(x_nchw, weight, bias, gamma, beta, *, max_pixel_tile=8192):
    """x_nchw: (N, Cin, H, W); weight: (Cout, Cin, 3, 3) (PyTorch layout)."""
    del bias  # conv bias cancels exactly under batch-statistics BatchNorm
    N, Cin, H, W = x_nchw.shape
    Cout = weight.shape[0]
    HW = H * W
    P = N * HW
    K9 = KH * KW * Cin

    if HW % 128 != 0:
        # TODO(synk): general fallback (flat pixel grid + trailing transpose) for
        # spatial sizes whose per-image pixel count is not a multiple of 128.
        raise NotImplementedError("block_forward requires H*W % 128 == 0")

    # Largest 128-multiple divisor of H*W that fits the target tile width:
    # tiles never straddle images, so pass-2 can store straight into the final
    # (N, Cout, H*W) layout and the grid keeps pipelining on every generation.
    pixel_tile = 128
    for d in range(1, HW // 128 + 1):
        cand = 128 * d
        if HW % cand == 0 and cand <= max_pixel_tile:
            pixel_tile = cand
    tpi = HW // pixel_tile          # tiles per image
    n_tiles = N * tpi               # total tiles

    # ---- layout glue (XLA, all bf16): transposed, K-folded im2col ----------
    # xcol_t[(ky*KW+kx)*Cin + c, n*HW + y*W + x] = x_pad[n, c, y+ky, x+kx]
    xp = jnp.pad(x_nchw.astype(jnp.bfloat16), ((0, 0), (0, 0), (1, 1), (1, 1)))
    taps = []
    for ky in range(KH):
        for kx in range(KW):
            tap = xp[:, :, ky:ky + H, kx:kx + W]                     # (N, Cin, H, W)
            taps.append(jnp.transpose(tap, (1, 0, 2, 3)).reshape(Cin, P))
    xcol_t = jnp.concatenate(taps, axis=0)                           # (9*Cin, P) bf16
    # TODO(synk): the 9 taps are still materialized in HBM (~9x input traffic);
    # forming them from a VMEM-resident halo tile needs overlapping blocks /
    # in-kernel sublane<->lane reshapes that this layout cannot express cleanly.

    # weight (Cout, Cin, KH, KW) -> (Cout, 9*Cin), tap-major then cin, matching xcol_t.
    w_t = jnp.transpose(weight.astype(jnp.float32), (0, 2, 3, 1)).reshape(Cout, K9)
    w_t = w_t.astype(jnp.bfloat16)

    # ---- pass 1: conv (bf16 intermediate) + per-tile BN partial sums --------
    conv_t, stats = pl.pallas_call(
        _conv_stats_kernel,
        out_shape=(jax.ShapeDtypeStruct((N, Cout, HW), jnp.bfloat16),
                   jax.ShapeDtypeStruct((Cout, n_tiles * STATS_LANES), jnp.float32)),
        grid_spec=pltpu.PrefetchScalarGridSpec(
            num_scalar_prefetch=0,
            grid=(N, tpi),
            in_specs=[pl.BlockSpec((Cout, K9), lambda n, t: (0, 0)),
                      pl.BlockSpec((K9, pixel_tile), lambda n, t: (0, n * tpi + t))],
            out_specs=[pl.BlockSpec((None, Cout, pixel_tile), lambda n, t: (n, 0, t)),
                       pl.BlockSpec((Cout, STATS_LANES), lambda n, t: (0, n * tpi + t))]),
        compiler_params=pltpu.CompilerParams(
            dimension_semantics=("parallel", "parallel")),
    )(w_t, xcol_t)

    # ---- tiny cross-tile stats combine + fold BN into one scale/shift -------
    stats = stats.reshape(Cout, n_tiles, STATS_LANES)
    s = jnp.sum(stats[:, :, 0], axis=1)
    ss = jnp.sum(stats[:, :, 1], axis=1)
    mean = s / P
    var = jnp.maximum(ss / P - mean * mean, 0.0)
    inv = lax.rsqrt(var + BN_EPS)
    g = gamma.astype(jnp.float32)
    scale = (g * inv).reshape(Cout, 1)
    shift = (beta.astype(jnp.float32) - mean * g * inv).reshape(Cout, 1)

    # ---- pass 2: fused affine + ReLU, written directly in NCHW order --------
    out = pl.pallas_call(
        _bn_relu_kernel,
        out_shape=jax.ShapeDtypeStruct((N, Cout, HW), jnp.float32),
        grid_spec=pltpu.PrefetchScalarGridSpec(
            num_scalar_prefetch=0,
            grid=(N, tpi),
            in_specs=[pl.BlockSpec((None, Cout, pixel_tile), lambda n, t: (n, 0, t)),
                      pl.BlockSpec((Cout, 1), lambda n, t: (0, 0)),
                      pl.BlockSpec((Cout, 1), lambda n, t: (0, 0))],
            out_specs=pl.BlockSpec((None, Cout, pixel_tile), lambda n, t: (n, 0, t))),
        compiler_params=pltpu.CompilerParams(
            dimension_semantics=("parallel", "parallel")),
    )(conv_t, scale, shift)

    # (N, Cout, H*W) -> (N, Cout, H, W): pure metadata reshape, no data movement.
    return out.reshape(N, Cout, H, W)


def _reference_forward(x_nchw, weight, bias, gamma, beta):
    """Pure-JAX f32 reference: Conv2d(3x3, pad=1) + BatchNorm(batch stats) + ReLU."""
    y = lax.conv_general_dilated(
        x_nchw.astype(jnp.float32), weight.astype(jnp.float32),
        window_strides=(1, 1), padding=((1, 1), (1, 1)),
        dimension_numbers=("NCHW", "OIHW", "NCHW"))
    y = y + bias.reshape(1, -1, 1, 1)
    mean = jnp.mean(y, axis=(0, 2, 3), keepdims=True)
    var = jnp.mean((y - mean) ** 2, axis=(0, 2, 3), keepdims=True)
    y = (y - mean) * lax.rsqrt(var + BN_EPS)
    y = y * gamma.reshape(1, -1, 1, 1) + beta.reshape(1, -1, 1, 1)
    return jnp.maximum(y, 0.0)


if __name__ == "__main__":
    # Small, deterministic synthetic setup (no checkpoint loading).
    N, Cin, H, W = 2, 4, 16, 16
    Cout = 8

    key = jax.random.PRNGKey(0)
    kx, kw, kb, kg, kbe = jax.random.split(key, 5)
    x = jax.random.normal(kx, (N, Cin, H, W), dtype=jnp.float32)
    weight = 0.1 * jax.random.normal(kw, (Cout, Cin, KH, KW), dtype=jnp.float32)
    bias = 0.1 * jax.random.normal(kb, (Cout,), dtype=jnp.float32)
    gamma = 1.0 + 0.1 * jax.random.normal(kg, (Cout,), dtype=jnp.float32)
    beta = 0.1 * jax.random.normal(kbe, (Cout,), dtype=jnp.float32)

    out = block_forward(x, weight, bias, gamma, beta)
    out = jax.block_until_ready(out)

    ref = _reference_forward(x, weight, bias, gamma, beta)
    assert out.shape == (N, Cout, H, W), out.shape
    # Tolerances account for bf16 MXU operands and the bf16-stored conv
    # intermediate (f32 accumulation, f32 BN/ReLU math).
    max_err = float(jnp.max(jnp.abs(out - ref)))
    mean_err = float(jnp.mean(jnp.abs(out - ref)))
    assert max_err < 6e-2, max_err
    assert mean_err < 1e-2, mean_err

    print("KERNEL_OK")
</pallas_src>

<mosaic_0001>
module attributes {stable_mosaic.version = 11 : i64} {
  func.func @_conv_stats_kernel(%arg0: i32, %arg1: i32, %arg2: memref<8x36xbf16, #tpu.memory_space<vmem>>, %arg3: memref<36x256xbf16, #tpu.memory_space<vmem>>, %arg4: memref<1x8x256xbf16, #tpu.memory_space<vmem>>, %arg5: memref<8x128xf32, #tpu.memory_space<vmem>>) attributes {dimension_semantics = [#tpu.dimension_semantics<parallel>, #tpu.dimension_semantics<parallel>], iteration_bounds = array<i64: 2, 1>, scalar_prefetch = 0 : i64, scratch_operands = 0 : i64, tpu.core_type = #tpu.core_type<tc>, window_params = [{pipeline_mode = #tpu.pipeline_mode<synchronous>, transform_indices = @transform_0, window_bounds = array<i64: 8, 36>}, {transform_indices = @transform_1, window_bounds = array<i64: 36, 256>}, {transform_indices = @transform_2, window_bounds = array<i64: 1, 8, 256>}, {transform_indices = @transform_3, window_bounds = array<i64: 8, 128>}]} {
    %c0 = arith.constant 0 : index
    %c0_0 = arith.constant 0 : index
    %0 = vector.load %arg2[%c0, %c0_0] : memref<8x36xbf16, #tpu.memory_space<vmem>>, vector<8x36xbf16>
    %c0_1 = arith.constant 0 : index
    %c0_2 = arith.constant 0 : index
    %1 = vector.load %arg3[%c0_1, %c0_2] : memref<36x256xbf16, #tpu.memory_space<vmem>>, vector<36x256xbf16>
    %cst = arith.constant dense<0.000000e+00> : vector<8x256xf32>
    %2 = tpu.matmul %0, %1, %cst {dimension_numbers = #tpu.dot_dimension_numbers<[1], [0], [0], [1], [0, 0, 1, 1], [], []>} : vector<8x36xbf16>, vector<36x256xbf16>, vector<8x256xf32> -> vector<8x256xf32>
    %3 = arith.truncf %2 : vector<8x256xf32> to vector<8x256xbf16>
    %c0_3 = arith.constant 0 : index
    %c0_4 = arith.constant 0 : index
    %c0_5 = arith.constant 0 : index
    %4 = vector.load %arg4[%c0_3, %c0_4, %c0_5] : memref<1x8x256xbf16, #tpu.memory_space<vmem>>, vector<1x8x256xbf16>
    %5 = vector.shape_cast %4 : vector<1x8x256xbf16> to vector<8x256xbf16>
    %6 = vector.shape_cast %3 : vector<8x256xbf16> to vector<1x8x256xbf16>
    tpu.vector_store %arg4[%c0_3, %c0_4, %c0_5], %6 {strides = array<i32>} : memref<1x8x256xbf16, #tpu.memory_space<vmem>>, vector<1x8x256xbf16>,
    %cst_6 = arith.constant dense<0.000000e+00> : vector<8xf32>
    %7 = vector.multi_reduction <add>, %2, %cst_6 [1] : vector<8x256xf32> to vector<8xf32>
    %8 = vector.shape_cast %7 : vector<8xf32> to vector<8x1xf32>
    %9 = arith.mulf %2, %2 : vector<8x256xf32>
    %cst_7 = arith.constant dense<0.000000e+00> : vector<8xf32>
    %10 = vector.multi_reduction <add>, %9, %cst_7 [1] : vector<8x256xf32> to vector<8xf32>
    %11 = vector.shape_cast %10 : vector<8xf32> to vector<8x1xf32>
    %12 = tpu.iota {dimensions = array<i32: 1>} : vector<8x128xi32>
    %c0_i32 = arith.constant 0 : i32
    %13 = vector.broadcast %c0_i32 : i32 to vector<8x128xi32>
    %14 = arith.cmpi eq, %12, %13 : vector<8x128xi32>
    %c1_i32 = arith.constant 1 : i32
    %15 = vector.broadcast %c1_i32 : i32 to vector<8x128xi32>
    %16 = arith.cmpi eq, %12, %15 : vector<8x128xi32>
    %cst_8 = arith.constant 0.000000e+00 : f32
    %17 = vector.shape_cast %11 : vector<8x1xf32> to vector<8x1xf32>
    %18 = vector.broadcast %17 : vector<8x1xf32> to vector<8x128xf32>
    %19 = vector.broadcast %cst_8 : f32 to vector<8x128xf32>
    %20 = arith.select %16, %18, %19 : vector<8x128xi1>, vector<8x128xf32>
    %21 = vector.shape_cast %8 : vector<8x1xf32> to vector<8x1xf32>
    %22 = vector.broadcast %21 : vector<8x1xf32> to vector<8x128xf32>
    %23 = arith.select %14, %22, %20 : vector<8x128xi1>, vector<8x128xf32>
    %c0_9 = arith.constant 0 : index
    %c0_10 = arith.constant 0 : index
    %24 = vector.load %arg5[%c0_9, %c0_10] : memref<8x128xf32, #tpu.memory_space<vmem>>, vector<8x128xf32>
    tpu.vector_store %arg5[%c0_9, %c0_10], %23 {strides = array<i32>} : memref<8x128xf32, #tpu.memory_space<vmem>>, vector<8x128xf32>,
    return
  }
  func.func @transform_0(%arg0: i32, %arg1: i32) -> (i32, i32) {
    %c0_i32 = arith.constant 0 : i32
    %c0_i32_0 = arith.constant 0 : i32
    %c0_i32_1 = arith.constant 0 : i32
    return %c0_i32, %c0_i32_0 : i32, i32
  }
  func.func @transform_1(%arg0: i32, %arg1: i32) -> (i32, i32) {
    %c1_i32 = arith.constant 1 : i32
    %0 = arith.muli %arg0, %c1_i32 : i32
    %1 = arith.addi %0, %arg1 : i32
    %c0_i32 = arith.constant 0 : i32
    %c0_i32_0 = arith.constant 0 : i32
    return %c0_i32, %1 : i32, i32
  }
  func.func @transform_2(%arg0: i32, %arg1: i32) -> (i32, i32, i32) {
    %c0_i32 = arith.constant 0 : i32
    %c0_i32_0 = arith.constant 0 : i32
    return %arg0, %c0_i32, %arg1 : i32, i32, i32
  }
  func.func @transform_3(%arg0: i32, %arg1: i32) -> (i32, i32) {
    %c1_i32 = arith.constant 1 : i32
    %0 = arith.muli %arg0, %c1_i32 : i32
    %1 = arith.addi %0, %arg1 : i32
    %c0_i32 = arith.constant 0 : i32
    %c0_i32_0 = arith.constant 0 : i32
    return %c0_i32, %1 : i32, i32
  }
}

module attributes {stable_mosaic.version = 11 : i64} {
  func.func @_bn_relu_kernel(%arg0: i32, %arg1: i32, %arg2: memref<1x8x256xbf16, #tpu.memory_space<vmem>>, %arg3: memref<8x1xf32, #tpu.memory_space<vmem>>, %arg4: memref<8x1xf32, #tpu.memory_space<vmem>>, %arg5: memref<1x8x256xf32, #tpu.memory_space<vmem>>) attributes {dimension_semantics = [#tpu.dimension_semantics<parallel>, #tpu.dimension_semantics<parallel>], iteration_bounds = array<i64: 2, 1>, scalar_prefetch = 0 : i64, scratch_operands = 0 : i64, tpu.core_type = #tpu.core_type<tc>, window_params = [{transform_indices = @transform_0, window_bounds = array<i64: 1, 8, 256>}, {pipeline_mode = #tpu.pipeline_mode<synchronous>, transform_indices = @transform_1, window_bounds = array<i64: 8, 1>}, {pipeline_mode = #tpu.pipeline_mode<synchronous>, transform_indices = @transform_2, window_bounds = array<i64: 8, 1>}, {transform_indices = @transform_3, window_bounds = array<i64: 1, 8, 256>}]} {
    %c0 = arith.constant 0 : index
    %c0_0 = arith.constant 0 : index
    %c0_1 = arith.constant 0 : index
    %0 = vector.load %arg2[%c0, %c0_0, %c0_1] : memref<1x8x256xbf16, #tpu.memory_space<vmem>>, vector<1x8x256xbf16>
    %1 = vector.shape_cast %0 : vector<1x8x256xbf16> to vector<8x256xbf16>
    %2 = arith.extf %1 : vector<8x256xbf16> to vector<8x256xf32>
    %c0_2 = arith.constant 0 : index
    %c0_3 = arith.constant 0 : index
    %3 = vector.load %arg3[%c0_2, %c0_3] : memref<8x1xf32, #tpu.memory_space<vmem>>, vector<8x1xf32>
    %4 = vector.broadcast %3 : vector<8x1xf32> to vector<8x256xf32>
    %5 = arith.mulf %2, %4 : vector<8x256xf32>
    %c0_4 = arith.constant 0 : index
    %c0_5 = arith.constant 0 : index
    %6 = vector.load %arg4[%c0_4, %c0_5] : memref<8x1xf32, #tpu.memory_space<vmem>>, vector<8x1xf32>
    %7 = vector.broadcast %6 : vector<8x1xf32> to vector<8x256xf32>
    %8 = arith.addf %5, %7 : vector<8x256xf32>
    %cst = arith.constant 0.000000e+00 : f32
    %9 = vector.broadcast %cst : f32 to vector<8x256xf32>
    %10 = arith.maximumf %8, %9 : vector<8x256xf32>
    %c0_6 = arith.constant 0 : index
    %c0_7 = arith.constant 0 : index
    %c0_8 = arith.constant 0 : index
    %11 = vector.load %arg5[%c0_6, %c0_7, %c0_8] : memref<1x8x256xf32, #tpu.memory_space<vmem>>, vector<1x8x256xf32>
    %12 = vector.shape_cast %11 : vector<1x8x256xf32> to vector<8x256xf32>
    %13 = vector.shape_cast %10 : vector<8x256xf32> to vector<1x8x256xf32>
    tpu.vector_store %arg5[%c0_6, %c0_7, %c0_8], %13 {strides = array<i32>} : memref<1x8x256xf32, #tpu.memory_space<vmem>>, vector<1x8x256xf32>,
    return
  }
  func.func @transform_0(%arg0: i32, %arg1: i32) -> (i32, i32, i32) {
    %c0_i32 = arith.constant 0 : i32
    %c0_i32_0 = arith.constant 0 : i32
    return %arg0, %c0_i32, %arg1 : i32, i32, i32
  }
  func.func @transform_1(%arg0: i32, %arg1: i32) -> (i32, i32) {
    %c0_i32 = arith.constant 0 : i32
    %c0_i32_0 = arith.constant 0 : i32
    %c0_i32_1 = arith.constant 0 : i32
    return %c0_i32, %c0_i32_0 : i32, i32
  }
  func.func @transform_2(%arg0: i32, %arg1: i32) -> (i32, i32) {
    %c0_i32 = arith.constant 0 : i32
    %c0_i32_0 = arith.constant 0 : i32
    %c0_i32_1 = arith.constant 0 : i32
    return %c0_i32, %c0_i32_0 : i32, i32
  }
  func.func @transform_3(%arg0: i32, %arg1: i32) -> (i32, i32, i32) {
    %c0_i32 = arith.constant 0 : i32
    %c0_i32_0 = arith.constant 0 : i32
    return %arg0, %c0_i32, %arg1 : i32, i32, i32
  }
}

</mosaic_0001>

<llo_original>
// kernel: block_forward.3
$region0: #{block_forward.3}
  #allocation0 [shape = 'u32[]', space=smem, size = 0x4, offset = 0x4, fixed_abs, tag = 'smem constant byte address 0x4 - core index']
  #allocation1 [shape = 'u32[144,128]{1,0:T(1,128)}', space=vmem, size = 0x12000, scoped, tag = 'internal scratch']
  %s0 = inlined_call_operand.vmem [shape: bf16[2,8,256], index: 0, kind: input, shape index: {}]
  %s1 = inlined_call_operand.vmem [shape: f32[8,1], index: 1, kind: input, shape index: {}]
  %s2 = inlined_call_operand.vmem [shape: f32[8,1], index: 2, kind: input, shape index: {}]
  %s3 = inlined_call_operand.vmem [shape: f32[2,8,256], index: 3, kind: output, shape index: {}]
  %s4 = sld [smem:[#allocation0]]
  $region45: #{block_forward.3} parent=0
    _
  %s6 = ssub.s32 1, %s4
  %s7 = scalar_select 0, %s6, %s4
  loop: start=0, step=1, limit=4
  $region2: #{block_forward.3} parent=0 // loop_pre_header
    _
  $region3: #{block_forward.3} parent=0 // loop_header
    %s9 = sphi 0, %s13
    %p10 = scmp.ge.s32.totalorder %s9, 4
    %s16 = sphi 0, %s28
    %s17 = sphi 0, %s24
    %s18 = sphi 0, %s16
    %s19 = sphi 0, %s17
    %s20 = sphi 0, %s18
    %s21 = sphi 0, %s19
    %s33 = sphi 0, %s35
    %s36 = sphi 0, %s33
    %s37 = sphi 0, %s36
    %s53 = sphi 0, %s37
    %s57 = sphi 0, %s57
    %s59 = sphi 0, %s57
    %s60 = sphi 0, %s59
    %s74 = sphi 0, %s60
    %s78 = sphi 0, %s78
    %s80 = sphi 0, %s78
    %s81 = sphi 0, %s80
    %s95 = sphi 0, %s81
    %s103 = sphi 0, %s105
    %s106 = sphi 0, %s103
    %s107 = sphi 0, %s106
    %s123 = sphi 0, %s107
  $region4: #{block_forward.3} parent=0 // loop_header_branch
    %12 = sbr.rel (%p10) target = $region8
  $region5: #{block_forward.3} parent=0 // loop_body
    %s14 = ssub.s32 %s9, 1
    %s15 = ssub.s32 %s9, 2
    %s22 = sadd.s32 1, %s17
    %p23 = scmp.ge.s32.totalorder %s22, 1
    %s24 = scalar_select %p23, 0, %s22
    %s25 = sadd.s32 1, %s16
    %s26 = scalar_select %p23, %s25, %s16
    %p27 = scmp.ge.s32.totalorder %s26, 2
    %s28 = scalar_select %p27, 0, %s26
    %s29 = ssub.s32 %s16, %s28
    %s30 = ssub.s32 %s17, %s24
    %s31 = sor.u32 %s29, %s30
    %p32 = scmp.eq.s32.totalorder %s31, 0
    %s34 = sadd.s32 %s33, 1
    %s35 = scalar_select %p32, %s33, %s34
    %p38 = pneg %p32
    %p39 = scmp.eq.s32.totalorder %s9, 1
    %p40 = por %p38, %p39
    %p41 = scmp.ne.s32.totalorder %s33, %s36
    %p42 = scmp.eq.s32.totalorder %s9, 0
    %p43 = por %p41, %p42
    %p44 = scmp.ne.s32.totalorder %s33, %s36
    %p45 = scmp.eq.s32.totalorder %s14, 1
    %p46 = por %p44, %p45
    %p47 = scmp.ne.s32.totalorder %s36, %s37
    %p48 = scmp.eq.s32.totalorder %s14, 0
    %p49 = por %p47, %p48
    %p50 = scmp.ne.s32.totalorder %s36, %s37
    %p51 = scmp.eq.s32.totalorder %s15, 1
    %p52 = por %p50, %p51
    %p54 = scmp.ne.s32.totalorder %s37, %s53
    %p55 = scmp.eq.s32.totalorder %s15, 0
    %p56 = por %p54, %p55
    %s58 = sadd.s32 %s57, 1
    %p61 = scmp.eq.s32.totalorder %s9, 1
    %p62 = scmp.ne.s32.totalorder %s57, %s59
    %p63 = scmp.eq.s32.totalorder %s9, 0
    %p64 = por %p62, %p63
    %p65 = scmp.ne.s32.totalorder %s57, %s59
    %p66 = scmp.eq.s32.totalorder %s14, 1
    %p67 = por %p65, %p66
    %p68 = scmp.ne.s32.totalorder %s59, %s60
    %p69 = scmp.eq.s32.totalorder %s14, 0
    %p70 = por %p68, %p69
    %p71 = scmp.ne.s32.totalorder %s59, %s60
    %p72 = scmp.eq.s32.totalorder %s15, 1
    %p73 = por %p71, %p72
    %p75 = scmp.ne.s32.totalorder %s60, %s74
    %p76 = scmp.eq.s32.totalorder %s15, 0
    %p77 = por %p75, %p76
    %s79 = sadd.s32 %s78, 1
    %p82 = scmp.eq.s32.totalorder %s9, 1
    %p83 = scmp.ne.s32.totalorder %s78, %s80
    %p84 = scmp.eq.s32.totalorder %s9, 0
    %p85 = por %p83, %p84
    %p86 = scmp.ne.s32.totalorder %s78, %s80
    %p87 = scmp.eq.s32.totalorder %s14, 1
    %p88 = por %p86, %p87
    %p89 = scmp.ne.s32.totalorder %s80, %s81
    %p90 = scmp.eq.s32.totalorder %s14, 0
    %p91 = por %p89, %p90
    %p92 = scmp.ne.s32.totalorder %s80, %s81
    %p93 = scmp.eq.s32.totalorder %s15, 1
    %p94 = por %p92, %p93
    %p96 = scmp.ne.s32.totalorder %s81, %s95
    %p97 = scmp.eq.s32.totalorder %s15, 0
    %p98 = por %p96, %p97
    %s99 = ssub.s32 %s16, %s28
    %s100 = ssub.s32 %s17, %s24
    %s101 = sor.u32 %s99, %s100
    %p102 = scmp.eq.s32.totalorder %s101, 0
    %s104 = sadd.s32 %s103, 1
    %s105 = scalar_select %p102, %s103, %s104
    %p108 = pneg %p102
    %p109 = scmp.eq.s32.totalorder %s9, 1
    %p110 = por %p108, %p109
    %p111 = scmp.ne.s32.totalorder %s103, %s106
    %p112 = scmp.eq.s32.totalorder %s9, 0
    %p113 = por %p111, %p112
    %p114 = scmp.ne.s32.totalorder %s103, %s106
    %p115 = scmp.eq.s32.totalorder %s14, 1
    %p116 = por %p114, %p115
    %p117 = scmp.ne.s32.totalorder %s106, %s107
    %p118 = scmp.eq.s32.totalorder %s14, 0
    %p119 = por %p117, %p118
    %p120 = scmp.ne.s32.totalorder %s106, %s107
    %p121 = scmp.eq.s32.totalorder %s15, 1
    %p122 = por %p120, %p121
    %p124 = scmp.ne.s32.totalorder %s107, %s123
    %p125 = scmp.eq.s32.totalorder %s15, 0
    %p126 = por %p124, %p125
    %p127 = scmp.le.s32.totalorder 1, %s9
    %p128 = scmp.lt.s32.totalorder %s9, 3
    %p129 = pnand %p127, %p128
    %p130 = pneg %p129
    // Predicated region
    $region9: #{block_forward.3} parent=5 // pred_check
      _
    $region10: #{block_forward.3} parent=5 // pred_check_branch
      %132 = sbr.rel (%p129) target = $region12
    $region11: #{block_forward.3} parent=5 // pred_region
      %s133 = ssub.s32 %s9, 1
      // Predicated region
      $region13: #{block_forward.3} parent=11 // pred_check
        %p134 = pneg %p70
      $region14: #{block_forward.3} parent=11 // pred_check_branch
        %136 = sbr.rel (%p134) target = $region16
      $region15: #{block_forward.3} parent=11 // pred_region
        _
      $region16: #{block_forward.3} parent=11 // pred_fallthru
        _
      // Predicated region
      $region17: #{block_forward.3} parent=11 // pred_check
        %p137 = pneg %p91
      $region18: #{block_forward.3} parent=11 // pred_check_branch
        %139 = sbr.rel (%p137) target = $region20
      $region19: #{block_forward.3} parent=11 // pred_region
        _
      $region20: #{block_forward.3} parent=11 // pred_fallthru
        _
    $region12: #{block_forward.3} parent=5 // pred_fallthru
      _
    %p140 = scmp.lt.s32.totalorder %s9, 2
    // Predicated region
    $region21: #{block_forward.3} parent=5 // pred_check
      %p141 = pneg %p140
    $region22: #{block_forward.3} parent=5 // pred_check_branch
      %143 = sbr.rel (%p141) target = $region24
    $region23: #{block_forward.3} parent=5 // pred_region
      // Predicated region
      $region25: #{block_forward.3} parent=23 // pred_check
        %p144 = pneg %p43
      $region26: #{block_forward.3} parent=23 // pred_check_branch
        %146 = sbr.rel (%p144) target = $region28
      $region27: #{block_forward.3} parent=23 // pred_region
        %s147 = smul.u32 2, %s17
        %p148 = scmp.lt.s32.totalorder %s16, 1
        %s149 = scalar_select %p148, %s16, 1
        %p150 = scmp.lt.s32.totalorder %s147, 1
        %s151 = scalar_select %p150, %s147, 1
        %s152 = smul.addr %s149, 2
        %s153 = sadd.s32 %s151, %s152
        %s154 = smul.addr %s153, 4
        %s155 = scalar_lea.vmem %s0, %s154
        %s156 = smul.u32 2, %s17
      $region28: #{block_forward.3} parent=23 // pred_fallthru
        _
    $region24: #{block_forward.3} parent=5 // pred_fallthru
      _
    %p157 = scmp.le.s32.totalorder 1, %s9
    %p158 = scmp.lt.s32.totalorder %s9, 3
    %p159 = pnand %p157, %p158
    %p160 = pneg %p159
    // Predicated region
    $region29: #{block_forward.3} parent=5 // pred_check
      _
    $region30: #{block_forward.3} parent=5 // pred_check_branch
      %162 = sbr.rel (%p159) target = $region32
    $region31: #{block_forward.3} parent=5 // pred_region
      %s163 = ssub.s32 %s9, 1
      %s164 = smul.u32 2, %s19
      %p165 = scmp.lt.s32.totalorder %s18, 1
      %s166 = scalar_select %p165, %s18, 1
      %p167 = scmp.lt.s32.totalorder %s164, 1
      %s168 = scalar_select %p167, %s164, 1
      %s169 = smul.addr %s166, 2
      %s170 = sadd.s32 %s168, %s169
      %s171 = smul.addr %s170, 4
      %s172 = scalar_lea.vmem %s0, %s171
      %p173 = pneg %p49
      %p174 = pneg %p46
      %p175 = pneg %p70
      %p176 = pneg %p67
      %p177 = pneg %p91
      %p178 = pneg %p88
      %p179 = pneg %p119
      %p180 = pneg %p116
      %s181 = smul.u32 2, %s19
      %p182 = scmp.lt.s32.totalorder %s18, 1
      %s183 = scalar_select %p182, %s18, 1
      %p184 = scmp.lt.s32.totalorder %s181, 1
      %s185 = scalar_select %p184, %s181, 1
      %s186 = smul.addr %s183, 2
      %s187 = sadd.s32 %s185, %s186
      %s188 = smul.addr %s187, 8
      %s189 = scalar_lea.vmem %s3, %s188
      %s190 = smul.u32 2, %s19
      %p191 = scmp.lt.s32.totalorder %s18, 1
      %s192 = scalar_select %p191, %s18, 1
      %p193 = scmp.lt.s32.totalorder %s190, 1
      %s194 = scalar_select %p193, %s190, 1
      %s195 = smul.addr %s192, 2
      %s196 = sadd.s32 %s194, %s195
      %s197 = smul.addr %s196, 4
      %s198 = scalar_lea.vmem %s0, %s197
      %s199 = smul.u32 2, %s19
      %s200 = smul.u32 2, %s19
      %p201 = scmp.lt.s32.totalorder %s18, 1
      %s202 = scalar_select %p201, %s18, 1
      %p203 = scmp.lt.s32.totalorder %s200, 1
      %s204 = scalar_select %p203, %s200, 1
      %s205 = smul.addr %s202, 2
      %s206 = sadd.s32 %s204, %s205
      %s207 = smul.addr %s206, 8
      %s208 = scalar_lea.vmem %s3, %s207
      %s209 = smul.u32 2, %s19
      %v210 = vld [vmem:[%s198] sm:$0xff]
      %v211 = vunpack.c.l.bf16 %v210
      %v212 = vunpack.c.h.bf16 %v210
      %v213 = vld [vmem:[%s1] sm:$0xff]
      %215 = vset.pattern.permute.xlu0 0
      %216 = vperm.xlu0 %215, %v213
      %v217 = vpop.permute.xlu0 %216
      %v219 = vmul.f32 %v211, %v217
      %v220 = vmul.f32 %v212, %v217
      %v221 = vld [vmem:[%s2] sm:$0xff]
      %223 = vset.pattern.permute.xlu0 0
      %224 = vperm.xlu0 %223, %v221
      %v225 = vpop.permute.xlu0 %224
      %v227 = vadd.f32 %v219, %v225
      %v228 = vadd.f32 %v220, %v225
      %v229 = vmax.f32 %v227, 0.0
      %v230 = vmax.f32 %v228, 0.0
      %231 = vst [vmem:[%s208] sm:$0xff] %v229
      %232 = vst [vmem:[%s208 + $0x8] sm:$0xff] %v230
      %s233 = smul.u32 2, %s19
      %p234 = scmp.lt.s32.totalorder %s18, 1
      %s235 = scalar_select %p234, %s18, 1
      %p236 = scmp.lt.s32.totalorder %s233, 1
      %s237 = scalar_select %p236, %s233, 1
      %s238 = smul.addr %s235, 2
      %s239 = sadd.s32 %s237, %s238
      %s240 = smul.addr %s239, 8
      %s241 = scalar_lea.vmem %s3, %s240
      // Predicated region
      $region33: #{block_forward.3} parent=31 // pred_check
        %p242 = pneg %p116
      $region34: #{block_forward.3} parent=31 // pred_check_branch
        %244 = sbr.rel (%p242) target = $region36
      $region35: #{block_forward.3} parent=31 // pred_region
        %s245 = smul.u32 2, %s19
      $region36: #{block_forward.3} parent=31 // pred_fallthru
        _
    $region32: #{block_forward.3} parent=5 // pred_fallthru
      _
    %p246 = scmp.le.s32.totalorder 2, %s9
    // Predicated region
    $region37: #{block_forward.3} parent=5 // pred_check
      %p247 = pneg %p246
    $region38: #{block_forward.3} parent=5 // pred_check_branch
      %249 = sbr.rel (%p247) target = $region40
    $region39: #{block_forward.3} parent=5 // pred_region
      %s250 = ssub.s32 %s9, 2
      // Predicated region
      $region41: #{block_forward.3} parent=39 // pred_check
        %p251 = pneg %p122
      $region42: #{block_forward.3} parent=39 // pred_check_branch
        %253 = sbr.rel (%p251) target = $region44
      $region43: #{block_forward.3} parent=39 // pred_region
        %s254 = smul.u32 2, %s21
        %p255 = scmp.lt.s32.totalorder %s20, 1
        %s256 = scalar_select %p255, %s20, 1
        %p257 = scmp.lt.s32.totalorder %s254, 1
        %s258 = scalar_select %p257, %s254, 1
        %s259 = smul.addr %s256, 2
        %s260 = sadd.s32 %s258, %s259
        %s261 = smul.addr %s260, 8
        %s262 = scalar_lea.vmem %s3, %s261
      $region44: #{block_forward.3} parent=39 // pred_fallthru
        _
    $region40: #{block_forward.3} parent=5 // pred_fallthru
      _
  $region6: #{block_forward.3} parent=0 // loop_footer
    %s13 = sadd.s32 1, %s9
  $region7: #{block_forward.3} parent=0 // loop_footer_branch
    %8 = sbr.rel target = $region3
  $region8: #{block_forward.3} parent=0 // loop_exit
    _

// kernel: block_forward.2
$region0: #{block_forward.2}
  #allocation0 [shape = 'u32[]', space=smem, size = 0x4, offset = 0x4, fixed_abs, tag = 'smem constant byte address 0x4 - core index']
  #allocation1 [shape = 'u32[144,128]{1,0:T(1,128)}', space=vmem, size = 0x12000, scoped, tag = 'internal scratch']
  %s0 = inlined_call_operand.vmem [shape: bf16[8,36], index: 0, kind: input, shape index: {}]
  %s1 = inlined_call_operand.vmem [shape: bf16[36,512], index: 1, kind: input, shape index: {}]
  %s2 = inlined_call_operand.vmem [shape: bf16[2,8,256], index: 2, kind: output, shape index: {0}]
  %s3 = inlined_call_operand.vmem [shape: f32[8,256], index: 3, kind: output, shape index: {1}]
  %4 = xla_tuple %s2, %s3
  %s5 = sld [smem:[#allocation0]]
  $region87: #{block_forward.2} parent=0
    _
  %s7 = ssub.s32 1, %s5
  %s8 = scalar_select 0, %s7, %s5
  $region1: #{block_forward.2} parent=0
    #allocation2 [shape = 'u8[40960]{0}', space=vmem, size = 0xa000, scoped, tag = 'input window, operand 1']
    loop: start=0, step=1, limit=4
    $region2: #{block_forward.2} parent=1 // loop_pre_header
      _
    $region3: #{block_forward.2} parent=1 // loop_header
      %s10 = sphi 0, %s14
      %p11 = scmp.ge.s32.totalorder %s10, 4
      %s17 = sphi 0, %s29
      %s18 = sphi 0, %s25
      %s19 = sphi 0, %s17
      %s20 = sphi 0, %s18
      %s21 = sphi 0, %s19
      %s22 = sphi 0, %s20
      %s30 = sphi 0, %s30
      %s32 = sphi 0, %s30
      %s33 = sphi 0, %s32
      %s47 = sphi 0, %s33
      %s55 = sphi 0, %s57
      %s58 = sphi 0, %s55
      %s59 = sphi 0, %s58
      %s75 = sphi 0, %s59
      %s83 = sphi 0, %s85
      %s86 = sphi 0, %s83
      %s87 = sphi 0, %s86
      %s103 = sphi 0, %s87
      %s111 = sphi 0, %s113
      %s114 = sphi 0, %s111
      %s115 = sphi 0, %s114
      %s131 = sphi 0, %s115
    $region4: #{block_forward.2} parent=1 // loop_header_branch
      %13 = sbr.rel (%p11) target = $region8
    $region5: #{block_forward.2} parent=1 // loop_body
      %s15 = ssub.s32 %s10, 1
      %s16 = ssub.s32 %s10, 2
      %s23 = sadd.s32 1, %s18
      %p24 = scmp.ge.s32.totalorder %s23, 1
      %s25 = scalar_select %p24, 0, %s23
      %s26 = sadd.s32 1, %s17
      %s27 = scalar_select %p24, %s26, %s17
      %p28 = scmp.ge.s32.totalorder %s27, 2
      %s29 = scalar_select %p28, 0, %s27
      %s31 = sadd.s32 %s30, 1
      %p34 = scmp.eq.s32.totalorder %s10, 1
      %p35 = scmp.ne.s32.totalorder %s30, %s32
      %p36 = scmp.eq.s32.totalorder %s10, 0
      %p37 = por %p35, %p36
      %p38 = scmp.ne.s32.totalorder %s30, %s32
      %p39 = scmp.eq.s32.totalorder %s15, 1
      %p40 = por %p38, %p39
      %p41 = scmp.ne.s32.totalorder %s32, %s33
      %p42 = scmp.eq.s32.totalorder %s15, 0
      %p43 = por %p41, %p42
      %p44 = scmp.ne.s32.totalorder %s32, %s33
      %p45 = scmp.eq.s32.totalorder %s16, 1
      %p46 = por %p44, %p45
      %p48 = scmp.ne.s32.totalorder %s33, %s47
      %p49 = scmp.eq.s32.totalorder %s16, 0
      %p50 = por %p48, %p49
      %s51 = sadd.s32 %s17, %s18
      %s52 = sadd.s32 %s29, %s25
      %s53 = ssub.s32 %s51, %s52
      %p54 = scmp.eq.s32.totalorder %s53, 0
      %s56 = sadd.s32 %s55, 1
      %s57 = scalar_select %p54, %s55, %s56
      %p60 = pneg %p54
      %p61 = scmp.eq.s32.totalorder %s10, 1
      %p62 = por %p60, %p61
      %p63 = scmp.ne.s32.totalorder %s55, %s58
      %p64 = scmp.eq.s32.totalorder %s10, 0
      %p65 = por %p63, %p64
      %p66 = scmp.ne.s32.totalorder %s55, %s58
      %p67 = scmp.eq.s32.totalorder %s15, 1
      %p68 = por %p66, %p67
      %p69 = scmp.ne.s32.totalorder %s58, %s59
      %p70 = scmp.eq.s32.totalorder %s15, 0
      %p71 = por %p69, %p70
      %p72 = scmp.ne.s32.totalorder %s58, %s59
      %p73 = scmp.eq.s32.totalorder %s16, 1
      %p74 = por %p72, %p73
      %p76 = scmp.ne.s32.totalorder %s59, %s75
      %p77 = scmp.eq.s32.totalorder %s16, 0
      %p78 = por %p76, %p77
      %s79 = ssub.s32 %s17, %s29
      %s80 = ssub.s32 %s18, %s25
      %s81 = sor.u32 %s79, %s80
      %p82 = scmp.eq.s32.totalorder %s81, 0
      %s84 = sadd.s32 %s83, 1
      %s85 = scalar_select %p82, %s83, %s84
      %p88 = pneg %p82
      %p89 = scmp.eq.s32.totalorder %s10, 1
      %p90 = por %p88, %p89
      %p91 = scmp.ne.s32.totalorder %s83, %s86
      %p92 = scmp.eq.s32.totalorder %s10, 0
      %p93 = por %p91, %p92
      %p94 = scmp.ne.s32.totalorder %s83, %s86
      %p95 = scmp.eq.s32.totalorder %s15, 1
      %p96 = por %p94, %p95
      %p97 = scmp.ne.s32.totalorder %s86, %s87
      %p98 = scmp.eq.s32.totalorder %s15, 0
      %p99 = por %p97, %p98
      %p100 = scmp.ne.s32.totalorder %s86, %s87
      %p101 = scmp.eq.s32.totalorder %s16, 1
      %p102 = por %p100, %p101
      %p104 = scmp.ne.s32.totalorder %s87, %s103
      %p105 = scmp.eq.s32.totalorder %s16, 0
      %p106 = por %p104, %p105
      %s107 = sadd.s32 %s17, %s18
      %s108 = sadd.s32 %s29, %s25
      %s109 = ssub.s32 %s107, %s108
      %p110 = scmp.eq.s32.totalorder %s109, 0
      %s112 = sadd.s32 %s111, 1
      %s113 = scalar_select %p110, %s111, %s112
      %p116 = pneg %p110
      %p117 = scmp.eq.s32.totalorder %s10, 1
      %p118 = por %p116, %p117
      %p119 = scmp.ne.s32.totalorder %s111, %s114
      %p120 = scmp.eq.s32.totalorder %s10, 0
      %p121 = por %p119, %p120
      %p122 = scmp.ne.s32.totalorder %s111, %s114
      %p123 = scmp.eq.s32.totalorder %s15, 1
      %p124 = por %p122, %p123
      %p125 = scmp.ne.s32.totalorder %s114, %s115
      %p126 = scmp.eq.s32.totalorder %s15, 0
      %p127 = por %p125, %p126
      %p128 = scmp.ne.s32.totalorder %s114, %s115
      %p129 = scmp.eq.s32.totalorder %s16, 1
      %p130 = por %p128, %p129
      %p132 = scmp.ne.s32.totalorder %s115, %s131
      %p133 = scmp.eq.s32.totalorder %s16, 0
      %p134 = por %p132, %p133
      %p135 = scmp.le.s32.totalorder 1, %s10
      %p136 = scmp.lt.s32.totalorder %s10, 3
      %p137 = pnand %p135, %p136
      %p138 = pneg %p137
      // Predicated region
      $region9: #{block_forward.2} parent=5 // pred_check
        _
      $region10: #{block_forward.2} parent=5 // pred_check_branch
        %140 = sbr.rel (%p137) target = $region12
      $region11: #{block_forward.2} parent=5 // pred_region
        %s141 = ssub.s32 %s10, 1
        // Predicated region
        $region13: #{block_forward.2} parent=11 // pred_check
          %p142 = pneg %p43
        $region14: #{block_forward.2} parent=11 // pred_check_branch
          %144 = sbr.rel (%p142) target = $region16
        $region15: #{block_forward.2} parent=11 // pred_region
          _
        $region16: #{block_forward.2} parent=11 // pred_fallthru
          _
      $region12: #{block_forward.2} parent=5 // pred_fallthru
        _
      %p145 = scmp.lt.s32.totalorder %s10, 2
      // Predicated region
      $region17: #{block_forward.2} parent=5 // pred_check
        %p146 = pneg %p145
      $region18: #{block_forward.2} parent=5 // pred_check_branch
        %148 = sbr.rel (%p146) target = $region20
      $region19: #{block_forward.2} parent=5 // pred_region
        // Predicated region
        $region21: #{block_forward.2} parent=19 // pred_check
          %p149 = pneg %p65
        $region22: #{block_forward.2} parent=19 // pred_check_branch
          %151 = sbr.rel (%p149) target = $region24
        $region23: #{block_forward.2} parent=19 // pred_region
          %s152 = sand.u32 %s55, 1
          %s153 = sand.u32 %s55, 1
          %s154 = smul.addr %s153, 40
          %s155 = scalar_lea.vmem [#allocation2], %s154
          %s156 = sadd.s32 %s17, %s18
          %s157 = smul.u32 2, %s156
          %s158 = smul.addr %s157, 4
          %s159 = scalar_lea.vmem %s1, %s158
          // Predicated region
          $region25: #{block_forward.2} parent=23 // pred_check
            _
          $region26: #{block_forward.2} parent=23 // pred_check_branch
            %161 = sbr.rel (0) target = $region28
          $region27: #{block_forward.2} parent=23 // pred_region
            // Predicated region
            $region29: #{block_forward.2} parent=27 // pred_check
              _
            $region30: #{block_forward.2} parent=27 // pred_check_branch
              %163 = sbr.rel (0) target = $region32
            $region31: #{block_forward.2} parent=27 // pred_region
              // Predicated region
              $region44: #{block_forward.2} parent=31 // pred_check
                _
              $region45: #{block_forward.2} parent=31 // pred_check_branch
                %186 = sbr.rel (0) target = $region47
              $region46: #{block_forward.2} parent=31 // pred_region
                loop: start=0, step=1, limit=1
                $region48: #{block_forward.2} parent=46 // loop_pre_header
                  _
                $region49: #{block_forward.2} parent=46 // loop_header
                  %s188 = sphi 0, %s192
                  %p189 = scmp.ge.s32.totalorder %s188, 1
                  %s193 = sphi %s159, %s159
                  %s194 = sphi %s155, %s155
                $region50: #{block_forward.2} parent=46 // loop_header_branch
                  %191 = sbr.rel (%p189) target = $region54
                $region51: #{block_forward.2} parent=46 // loop_body
                  %v195 = vld [vmem:[%s193] sm:$0xff]
                  %196 = vst [vmem:[%s194] sm:$0xff] %v195
                  %v197 = vld [vmem:[%s193 + $0x10] sm:$0xff]
                  %198 = vst [vmem:[%s194 + $0x8] sm:$0xff] %v197
                  %v199 = vld [vmem:[%s193 + $0x20] sm:$0xff]
                  %200 = vst [vmem:[%s194 + $0x10] sm:$0xff] %v199
                  %v201 = vld [vmem:[%s193 + $0x30] sm:$0xff]
                  %202 = vst [vmem:[%s194 + $0x18] sm:$0xff] %v201
                  %v203 = vld [vmem:[%s193 + $0x40] sm:$0xff]
                  %204 = vst [vmem:[%s194 + $0x20] sm:$0xff] %v203
                $region52: #{block_forward.2} parent=46 // loop_footer
                  %s192 = sadd.s32 1, %s188
                $region53: #{block_forward.2} parent=46 // loop_footer_branch
                  %187 = sbr.rel target = $region49
                $region54: #{block_forward.2} parent=46 // loop_exit
                  _
              $region47: #{block_forward.2} parent=31 // pred_fallthru
                _
              // Predicated region
              $region55: #{block_forward.2} parent=31 // pred_check
                _
              $region56: #{block_forward.2} parent=31 // pred_check_branch
                %206 = sbr.rel target = $region58
              $region57: #{block_forward.2} parent=31 // pred_region
                _
              $region58: #{block_forward.2} parent=31 // pred_fallthru
                _
            $region32: #{block_forward.2} parent=27 // pred_fallthru
              _
            // Predicated region
            $region33: #{block_forward.2} parent=27 // pred_check
              _
            $region34: #{block_forward.2} parent=27 // pred_check_branch
              %165 = sbr.rel target = $region36
            $region35: #{block_forward.2} parent=27 // pred_region
              loop: start=0, step=1, limit=1
              $region37: #{block_forward.2} parent=35 // loop_pre_header
                _
              $region38: #{block_forward.2} parent=35 // loop_header
                %s168 = sphi 0, %s172
                %p169 = scmp.ge.s32.totalorder %s168, 1
                %s173 = sphi %s159, %s159
                %s174 = sphi %s155, %s155
              $region39: #{block_forward.2} parent=35 // loop_header_branch
                %171 = sbr.rel (%p169) target = $region43
              $region40: #{block_forward.2} parent=35 // loop_body
                %v175 = vld [vmem:[%s173] sm:$0xff]
                %176 = vst [vmem:[%s174] sm:$0xff] %v175
                %v177 = vld [vmem:[%s173 + $0x10] sm:$0xff]
                %178 = vst [vmem:[%s174 + $0x8] sm:$0xff] %v177
                %v179 = vld [vmem:[%s173 + $0x20] sm:$0xff]
                %180 = vst [vmem:[%s174 + $0x10] sm:$0xff] %v179
                %v181 = vld [vmem:[%s173 + $0x30] sm:$0xff]
                %182 = vst [vmem:[%s174 + $0x18] sm:$0xff] %v181
                %v183 = vld [vmem:[%s173 + $0x40] sm:$0xff]
                %184 = vst [vmem:[%s174 + $0x20] sm:$0xff] %v183
              $region41: #{block_forward.2} parent=35 // loop_footer
                %s172 = sadd.s32 1, %s168
              $region42: #{block_forward.2} parent=35 // loop_footer_branch
                %167 = sbr.rel target = $region38
              $region43: #{block_forward.2} parent=35 // loop_exit
                _
            $region36: #{block_forward.2} parent=27 // pred_fallthru
              _
          $region28: #{block_forward.2} parent=23 // pred_fallthru
            _
          %207 = vnop
        $region24: #{block_forward.2} parent=19 // pred_fallthru
          _
      $region20: #{block_forward.2} parent=5 // pred_fallthru
        _
      %p208 = scmp.le.s32.totalorder 1, %s10
      %p209 = scmp.lt.s32.totalorder %s10, 3
      %p210 = pnand %p208, %p209
      %p211 = pneg %p210
      // Predicated region
      $region59: #{block_forward.2} parent=5 // pred_check
        _
      $region60: #{block_forward.2} parent=5 // pred_check_branch
        %213 = sbr.rel (%p210) target = $region62
      $region61: #{block_forward.2} parent=5 // pred_region
        %s214 = ssub.s32 %s10, 1
        %s215 = sand.u32 %s58, 1
        %s216 = sand.u32 %s58, 1
        %s217 = smul.addr %s216, 40
        %s218 = scalar_lea.vmem [#allocation2], %s217
        // Predicated region
        $region63: #{block_forward.2} parent=61 // pred_check
          %p219 = pneg %p71
        $region64: #{block_forward.2} parent=61 // pred_check_branch
          %221 = sbr.rel (%p219) target = $region66
        $region65: #{block_forward.2} parent=61 // pred_region
          _
        $region66: #{block_forward.2} parent=61 // pred_fallthru
          _
        %p222 = pneg %p43
        %p223 = pneg %p40
        %s224 = sand.u32 %s58, 1
        %s225 = sand.u32 %s58, 1
        %s226 = smul.addr %s225, 40
        %s227 = scalar_lea.vmem [#allocation2], %s226
        %p228 = pneg %p71
        %p229 = pneg %p68
        %p230 = pneg %p99
        %p231 = pneg %p96
        %s232 = smul.u32 2, %s20
        %p233 = scmp.lt.s32.totalorder %s19, 1
        %s234 = scalar_select %p233, %s19, 1
        %p235 = scmp.lt.s32.totalorder %s232, 1
        %s236 = scalar_select %p235, %s232, 1
        %s237 = smul.addr %s234, 2
        %s238 = sadd.s32 %s236, %s237
        %s239 = smul.addr %s238, 4
        %s240 = scalar_lea.vmem %s2, %s239
        %p241 = pneg %p127
        %p242 = pneg %p124
        %s243 = sadd.s32 %s19, %s20
        %p244 = scmp.lt.s32.totalorder %s243, 1
        %s245 = scalar_select %p244, %s243, 1
        %s246 = smul.addr %s245, 8
        %s247 = scalar_lea.vmem %s3, %s246
        %s248 = sadd.s32 %s19, %s20
        %s249 = smul.u32 2, %s248
        %s250 = smul.u32 2, %s20
        %p251 = scmp.lt.s32.totalorder %s19, 1
        %s252 = scalar_select %p251, %s19, 1
        %p253 = scmp.lt.s32.totalorder %s250, 1
        %s254 = scalar_select %p253, %s250, 1
        %s255 = smul.addr %s252, 2
        %s256 = sadd.s32 %s254, %s255
        %s257 = smul.addr %s256, 4
        %s258 = scalar_lea.vmem %s2, %s257
        %s259 = smul.u32 2, %s20
        %s260 = sadd.s32 %s19, %s20
        %p261 = scmp.lt.s32.totalorder %s260, 1
        %s262 = scalar_select %p261, %s260, 1
        %s263 = smul.addr %s262, 8
        %s264 = scalar_lea.vmem %s3, %s263
        %s265 = sadd.s32 %s19, %s20
        %v267 = vld [vmem:[%s0] sm:$0xf]
        %v268 = vld [vmem:[%s218] sm:$0xff]
        %v269 = vld [vmem:[%s218 + $0x8] sm:$0xff]
        %v270 = vld [vmem:[%s218 + $0x10] sm:$0xff]
        %v271 = vld [vmem:[%s218 + $0x18] sm:$0xff]
        %v272 = vld [vmem:[%s218 + $0x20] sm:$0x33]
        %v278 = vunpack.c.l.b16 %v268
        %v279 = vunpack.c.h.b16 %v268
        %v280 = vunpack.c.l.b16 %v269
        %v281 = vunpack.c.h.b16 %v269
        %v282 = vunpack.c.l.b16 %v270
        %v283 = vunpack.c.h.b16 %v270
        %v284 = vunpack.c.l.b16 %v271
        %v285 = vunpack.c.h.b16 %v271
        %v286 = vunpack.c.l.b16 %v272
        %v287 = vunpack.c.h.b16 %v272
        %v288 = vpack.c.b16 %v280, %v278
        %v289 = vpack.c.b16 %v281, %v279
        %v290 = vpack.c.b16 %v284, %v282
        %v291 = vpack.c.b16 %v285, %v283
        %v292 = vpack.c.b16 %v286, %v286
        %v293 = vpack.c.b16 %v287, %v287
        %vm298 = vcmask 293888
        %v300 = vsel %vm298, %v267, 0
        %vm302 = vcmask 1041408
        %v304 = vsel %vm302, %v292, 0
        %v307 = vsel %vm302, %v293, 0
        %309 = vmatprep.subr.bf16.mxu0 %v289
        %310 = vmatpush1.bf16.msra.mxu0 %v288
        %311 = vmatprep.subr.bf16.mxu0 %v291
        %312 = vmatpush1.bf16.msra.mxu0 %v290
        %313 = vmatprep.subr.bf16.mxu0 %v307
        %314 = vmatpush1.bf16.msra.mxu0 %v304
        %315 = vmatprep.subr.bf16.mxu0 0
        %316 = vmatpush1.bf16.msra.mxu0 0
        %317 = vmatprep.subr.bf16.mxu0 0
        %318 = vmatpush1.bf16.msra.mxu0 0
        %319 = vmatprep.subr.bf16.mxu0 0
        %320 = vmatpush1.bf16.msra.mxu0 0
        %321 = vmatprep.subr.bf16.mxu0 0
        %322 = vmatpush1.bf16.msra.mxu0 0
        %323 = vmatprep.subr.bf16.mxu0 0
        %324 = vmatpush1.bf16.msra.mxu0 0
        %325 = vmatprep.subr.bf16.mxu0 0
        %326 = vmatpush1.bf16.msra.mxu0 0
        %327 = vmatprep.subr.bf16.mxu0 0
        %328 = vmatpush1.bf16.msra.mxu0 0
        %329 = vmatprep.subr.bf16.mxu0 0
        %330 = vmatpush1.bf16.msra.mxu0 0
        %331 = vmatprep.subr.bf16.mxu0 0
        %332 = vmatpush1.bf16.msra.mxu0 0
        %333 = vmatprep.subr.bf16.mxu0 0
        %334 = vmatpush1.bf16.msra.mxu0 0
        %335 = vmatprep.subr.bf16.mxu0 0
        %336 = vmatpush1.bf16.msra.mxu0 0
        %337 = vmatprep.subr.bf16.mxu0 0
        %338 = vmatpush1.bf16.msra.mxu0 0
        %339 = vmatprep.subr.bf16.mxu0 0
        %340 = vmatpush1.bf16.msra.mxu0 0
        %341 = vmatprep.mubr.bf16.mxu0 0
        %342 = vmatmul.mubr.bf16.gmra.mrb[0].mxu0 %v300
        %v343 = vpop.f32.mrb[0].mxu0
        %v344 = vadd.f32 0.0, %v343
        %v345 = vpop.f32.mrb[0].mxu0
        %v346 = vadd.f32 0.0, %v345
        %v347 = vpop.f32.mrb[0].mxu0
        %v348 = vpop.f32.mrb[0].mxu0
        %349 = vdwg.mxu0
        %v350 = vpack.c.bf16 %v344, %v344
        %v351 = vpack.c.bf16 %v346, %v346
        %v354 = vunpack.c.l.b16 %v350
        %v355 = vunpack.c.l.b16 %v351
        %v356 = vpack.c.b16 %v355, %v354
        %358 = vst [vmem:[%s258] sm:$0xff] %v356
        %v359 = vadd.f32 %v344, %v346
        %360 = vadd.xlane.f32.xlu0 %v359
        %v361 = vpop.xlane.xlu0 %360
        %v362 = vmul.f32 %v344, %v344
        %v363 = vmul.f32 %v346, %v346
        %v364 = vadd.f32 %v362, %v363
        %365 = vadd.xlane.f32.xlu0 %v364
        %v366 = vpop.xlane.xlu0 %365
        %v367 = vlaneseq
        %v368 = vand.u32 %v367, 127
        %vm369 = vcmp.eq.s32.totalorder %v368, 0
        %vm370 = vcmp.eq.s32.totalorder %v368, 1
        %v371 = vsel %vm370, %v366, 0.0
        %v372 = vsel %vm369, %v361, %v371
        %373 = vst [vmem:[%s264] sm:$0xff] %v372
        %s374 = smul.u32 2, %s20
        %p375 = scmp.lt.s32.totalorder %s19, 1
        %s376 = scalar_select %p375, %s19, 1
        %p377 = scmp.lt.s32.totalorder %s374, 1
        %s378 = scalar_select %p377, %s374, 1
        %s379 = smul.addr %s376, 2
        %s380 = sadd.s32 %s378, %s379
        %s381 = smul.addr %s380, 4
        %s382 = scalar_lea.vmem %s2, %s381
        %s383 = sadd.s32 %s19, %s20
        %p384 = scmp.lt.s32.totalorder %s383, 1
        %s385 = scalar_select %p384, %s383, 1
        %s386 = smul.addr %s385, 8
        %s387 = scalar_lea.vmem %s3, %s386
        // Predicated region
        $region67: #{block_forward.2} parent=61 // pred_check
          %p388 = pneg %p96
        $region68: #{block_forward.2} parent=61 // pred_check_branch
          %390 = sbr.rel (%p388) target = $region70
        $region69: #{block_forward.2} parent=61 // pred_region
          %s391 = smul.u32 2, %s20
        $region70: #{block_forward.2} parent=61 // pred_fallthru
          _
        // Predicated region
        $region71: #{block_forward.2} parent=61 // pred_check
          %p392 = pneg %p124
        $region72: #{block_forward.2} parent=61 // pred_check_branch
          %394 = sbr.rel (%p392) target = $region74
        $region73: #{block_forward.2} parent=61 // pred_region
          %s395 = sadd.s32 %s19, %s20
        $region74: #{block_forward.2} parent=61 // pred_fallthru
          _
      $region62: #{block_forward.2} parent=5 // pred_fallthru
        _
      %p396 = scmp.le.s32.totalorder 2, %s10
      // Predicated region
      $region75: #{block_forward.2} parent=5 // pred_check
        %p397 = pneg %p396
      $region76: #{block_forward.2} parent=5 // pred_check_branch
        %399 = sbr.rel (%p397) target = $region78
      $region77: #{block_forward.2} parent=5 // pred_region
        %s400 = ssub.s32 %s10, 2
        // Predicated region
        $region79: #{block_forward.2} parent=77 // pred_check
          %p401 = pneg %p102
        $region80: #{block_forward.2} parent=77 // pred_check_branch
          %403 = sbr.rel (%p401) target = $region82
        $region81: #{block_forward.2} parent=77 // pred_region
          %s404 = smul.u32 2, %s22
          %p405 = scmp.lt.s32.totalorder %s21, 1
          %s406 = scalar_select %p405, %s21, 1
          %p407 = scmp.lt.s32.totalorder %s404, 1
          %s408 = scalar_select %p407, %s404, 1
          %s409 = smul.addr %s406, 2
          %s410 = sadd.s32 %s408, %s409
          %s411 = smul.addr %s410, 4
          %s412 = scalar_lea.vmem %s2, %s411
        $region82: #{block_forward.2} parent=77 // pred_fallthru
          _
        // Predicated region
        $region83: #{block_forward.2} parent=77 // pred_check
          %p413 = pneg %p130
        $region84: #{block_forward.2} parent=77 // pred_check_branch
          %415 = sbr.rel (%p413) target = $region86
        $region85: #{block_forward.2} parent=77 // pred_region
          %s416 = sadd.s32 %s21, %s22
          %p417 = scmp.lt.s32.totalorder %s416, 1
          %s418 = scalar_select %p417, %s416, 1
          %s419 = smul.addr %s418, 8
          %s420 = scalar_lea.vmem %s3, %s419
        $region86: #{block_forward.2} parent=77 // pred_fallthru
          _
      $region78: #{block_forward.2} parent=5 // pred_fallthru
        _
    $region6: #{block_forward.2} parent=1 // loop_footer
      %s14 = sadd.s32 1, %s10
    $region7: #{block_forward.2} parent=1 // loop_footer_branch
      %9 = sbr.rel target = $region3
    $region8: #{block_forward.2} parent=1 // loop_exit
      _

</llo_original>
